<compile_context>
chip_gen: v6e
topology: v6e:2x2x1
jax: 0.10.0
libtpu: 0.0.40
codegen_flags: <defaults>
</compile_context>

<pallas_src>
import jax
import jax.numpy as jnp
import numpy as np
from jax.experimental import pallas as pl
from jax.experimental.pallas import tpu as pltpu


def _block_kernel(xp_ref, w1_ref, b1_ref, w2_ref, b2_ref, o_ref):
    """One batch element.

    xp_ref : (1, H+2, W*Cin)     row-zero-padded input, W & Cin folded on lanes
    w1_ref : (3, W*Cin, W*Cout)  banded conv1 weights (one slab per kernel row)
    b1_ref : (1, W*Cout)         conv1 bias tiled along W (f32)
    w2_ref : (3, W*Cout, W*Cout) banded conv2 weights
    b2_ref : (1, W*Cout)         conv2 bias tiled along W (f32)
    o_ref  : (1, H, W*Cout)      lane-dense output rows
    """
    H = o_ref.shape[1]
    WC = o_ref.shape[2]

    xp = xp_ref[0]                                          # (H+2, W*Cin)

    # ---- conv1: 3 banded matmuls (dy = 0,1,2); K = W*Cin, N = W*Cout ----
    acc1 = jnp.dot(xp[0:H], w1_ref[0], preferred_element_type=jnp.float32)
    acc1 = acc1 + jnp.dot(xp[1:H + 1], w1_ref[1],
                          preferred_element_type=jnp.float32)
    acc1 = acc1 + jnp.dot(xp[2:H + 2], w1_ref[2],
                          preferred_element_type=jnp.float32)
    h1 = jnp.maximum(acc1 + b1_ref[...], 0.0)               # (H, W*Cout), f32

    # ---- 1-row top/bottom zero pad entirely in registers (no VMEM scratch) ----
    h1 = h1.astype(w2_ref.dtype)
    zrow = jnp.zeros((1, WC), h1.dtype)
    h1p = jnp.concatenate([zrow, h1, zrow], axis=0)         # (H+2, W*Cout)

    # ---- conv2: 3 banded matmuls; K = W*Cout, N = W*Cout ----
    acc2 = jnp.dot(h1p[0:H], w2_ref[0], preferred_element_type=jnp.float32)
    acc2 = acc2 + jnp.dot(h1p[1:H + 1], w2_ref[1],
                          preferred_element_type=jnp.float32)
    acc2 = acc2 + jnp.dot(h1p[2:H + 2], w2_ref[2],
                          preferred_element_type=jnp.float32)
    out = jnp.maximum(acc2 + b2_ref[...], 0.0)              # (H, W*Cout), f32
    o_ref[...] = out.reshape(1, H, WC).astype(o_ref.dtype)


def _banded_weights(w, W):
    """Fold a (3,3,Ci,Co) HWIO conv weight into 3 block-banded (W*Ci, W*Co) mats.

    Wbig[dy, xin*Ci+ci, xout*Co+co] = w[dy, xin-xout+1, ci, co] if |xin-xout|<=1,
    else 0.  The band structure implements the width-direction zero padding, so
    the input only needs row (height) padding.
    """
    _, _, Ci, Co = w.shape
    xin = jnp.arange(W)[:, None, None]
    xout = jnp.arange(W)[None, :, None]
    dx = jnp.arange(3)[None, None, :]
    sel = (xin == xout + dx - 1).astype(w.dtype)            # (W, W, 3)
    wb = jnp.einsum("xyd,kdio->kxiyo", sel, w)              # (3, W, Ci, W, Co)
    return wb.reshape(3, W * Ci, W * Co)


def block_forward(x_nchw, w1, b1, w2, b2, *, use_bf16=False):
    """UNet Block forward.  x_nchw: (N, Cin, H, W) f32 -> (N, Cout, H, W) f32.

    use_bf16=True casts the matmul operands (input + folded weights) to
    bfloat16 for the v6e/v7x MXU; accumulation, bias and ReLU stay float32.
    """
    N, Cin, H, W = x_nchw.shape
    Cout = w1.shape[-1]
    op_dtype = jnp.bfloat16 if use_bf16 else jnp.float32

    # --- glue: layout plumbing + weight folding (plain JAX) ---
    x = jnp.transpose(x_nchw, (0, 2, 3, 1)).reshape(N, H, W * Cin)
    x = jnp.pad(x, ((0, 0), (1, 1), (0, 0))).astype(op_dtype)   # (N, H+2, W*Cin)
    w1b = _banded_weights(w1, W).astype(op_dtype)               # (3, W*Cin,  W*Cout)
    w2b = _banded_weights(w2, W).astype(op_dtype)               # (3, W*Cout, W*Cout)
    b1r = jnp.tile(b1, W).reshape(1, W * Cout).astype(jnp.float32)
    b2r = jnp.tile(b2, W).reshape(1, W * Cout).astype(jnp.float32)

    out = pl.pallas_call(
        _block_kernel,
        out_shape=jax.ShapeDtypeStruct((N, H, W * Cout), jnp.float32),
        grid_spec=pltpu.PrefetchScalarGridSpec(
            num_scalar_prefetch=0,
            grid=(N,),
            in_specs=[
                pl.BlockSpec((1, H + 2, W * Cin), lambda b: (b, 0, 0)),
                pl.BlockSpec((3, W * Cin, W * Cout), lambda b: (0, 0, 0)),
                pl.BlockSpec((1, W * Cout), lambda b: (0, 0)),
                pl.BlockSpec((3, W * Cout, W * Cout), lambda b: (0, 0, 0)),
                pl.BlockSpec((1, W * Cout), lambda b: (0, 0)),
            ],
            out_specs=pl.BlockSpec((1, H, W * Cout), lambda b: (b, 0, 0)),
        ),
        compiler_params=pltpu.CompilerParams(
            dimension_semantics=("parallel",)),
        # TODO(synk): for large H/W/C, tile the grid over H (1-row halo) and set
        # vmem_limit_bytes explicitly (v7x has 64 MiB VMEM, v5e 16 MiB scoped default).
    )(x, w1b, b1r, w2b, b2r)

    out = out.reshape(N, H, W, Cout)
    return jnp.transpose(out, (0, 3, 1, 2))                 # -> NCHW


def _reference(x_nchw, w1, b1, w2, b2):
    """Plain-JAX reference (same math as the PyTorch module)."""
    x = jnp.transpose(x_nchw, (0, 2, 3, 1))
    dn = ("NHWC", "HWIO", "NHWC")
    y = jax.lax.conv_general_dilated(x, w1, (1, 1), "SAME", dimension_numbers=dn)
    y = jnp.maximum(y + b1, 0.0)
    y = jax.lax.conv_general_dilated(y, w2, (1, 1), "SAME", dimension_numbers=dn)
    y = jnp.maximum(y + b2, 0.0)
    return jnp.transpose(y, (0, 3, 1, 2))


if __name__ == "__main__":
    # Block(inChannels=4, outChannels=8); small deterministic shapes.
    N, Cin, Cout, H, W = 2, 4, 8, 16, 16
    key = jax.random.PRNGKey(0)
    kx, k1, k2, k3, k4 = jax.random.split(key, 5)

    x = jax.random.normal(kx, (N, Cin, H, W), dtype=jnp.float32)
    fan1 = Cin * 9
    fan2 = Cout * 9
    w1 = jax.random.uniform(k1, (3, 3, Cin, Cout), jnp.float32,
                            -1.0 / np.sqrt(fan1), 1.0 / np.sqrt(fan1))
    b1 = jax.random.uniform(k2, (Cout,), jnp.float32,
                            -1.0 / np.sqrt(fan1), 1.0 / np.sqrt(fan1))
    w2 = jax.random.uniform(k3, (3, 3, Cout, Cout), jnp.float32,
                            -1.0 / np.sqrt(fan2), 1.0 / np.sqrt(fan2))
    b2 = jax.random.uniform(k4, (Cout,), jnp.float32,
                            -1.0 / np.sqrt(fan2), 1.0 / np.sqrt(fan2))

    ref = jax.block_until_ready(_reference(x, w1, b1, w2, b2))

    # f32 path (exact match to the PyTorch semantics)
    out = jax.block_until_ready(block_forward(x, w1, b1, w2, b2))
    assert out.shape == (N, Cout, H, W), out.shape
    np.testing.assert_allclose(np.asarray(out), np.asarray(ref),
                               rtol=1e-5, atol=1e-5)

    # bf16-operand path (v6e/v7x MXU feed); f32 accumulation -> loose tolerance.
    out_bf16 = jax.block_until_ready(block_forward(x, w1, b1, w2, b2,
                                                   use_bf16=True))
    np.testing.assert_allclose(np.asarray(out_bf16), np.asarray(ref),
                               rtol=1e-1, atol=1e-1)

    print("KERNEL_OK")
</pallas_src>

<mosaic_0001>
module attributes {stable_mosaic.version = 11 : i64} {
  func.func @_block_kernel(%arg0: i32, %arg1: memref<1x18x64xf32, #tpu.memory_space<vmem>>, %arg2: memref<3x64x128xf32, #tpu.memory_space<vmem>>, %arg3: memref<1x128xf32, #tpu.memory_space<vmem>>, %arg4: memref<3x128x128xf32, #tpu.memory_space<vmem>>, %arg5: memref<1x128xf32, #tpu.memory_space<vmem>>, %arg6: memref<1x16x128xf32, #tpu.memory_space<vmem>>) attributes {dimension_semantics = [#tpu.dimension_semantics<parallel>], iteration_bounds = array<i64: 2>, scalar_prefetch = 0 : i64, scratch_operands = 0 : i64, tpu.core_type = #tpu.core_type<tc>, window_params = [{transform_indices = @transform_0, window_bounds = array<i64: 1, 18, 64>}, {pipeline_mode = #tpu.pipeline_mode<synchronous>, transform_indices = @transform_1, window_bounds = array<i64: 3, 64, 128>}, {pipeline_mode = #tpu.pipeline_mode<synchronous>, transform_indices = @transform_2, window_bounds = array<i64: 1, 128>}, {pipeline_mode = #tpu.pipeline_mode<synchronous>, transform_indices = @transform_3, window_bounds = array<i64: 3, 128, 128>}, {pipeline_mode = #tpu.pipeline_mode<synchronous>, transform_indices = @transform_4, window_bounds = array<i64: 1, 128>}, {transform_indices = @transform_5, window_bounds = array<i64: 1, 16, 128>}]} {
    %c0 = arith.constant 0 : index
    %c0_0 = arith.constant 0 : index
    %c0_1 = arith.constant 0 : index
    %0 = vector.load %arg1[%c0, %c0_0, %c0_1] : memref<1x18x64xf32, #tpu.memory_space<vmem>>, vector<1x18x64xf32>
    %1 = vector.shape_cast %0 : vector<1x18x64xf32> to vector<18x64xf32>
    %2 = vector.extract_strided_slice %1 {offsets = [0, 0], sizes = [16, 64], strides = [1, 1]} : vector<18x64xf32> to vector<16x64xf32>
    %c0_2 = arith.constant 0 : index
    %c0_3 = arith.constant 0 : index
    %c0_4 = arith.constant 0 : index
    %3 = vector.load %arg2[%c0_2, %c0_3, %c0_4] : memref<3x64x128xf32, #tpu.memory_space<vmem>>, vector<1x64x128xf32>
    %4 = vector.shape_cast %3 : vector<1x64x128xf32> to vector<64x128xf32>
    %cst = arith.constant dense<0.000000e+00> : vector<16x128xf32>
    %5 = tpu.matmul %2, %4, %cst {dimension_numbers = #tpu.dot_dimension_numbers<[1], [0], [0], [1], [0, 0, 1, 1], [], []>} : vector<16x64xf32>, vector<64x128xf32>, vector<16x128xf32> -> vector<16x128xf32>
    %6 = vector.extract_strided_slice %1 {offsets = [1, 0], sizes = [16, 64], strides = [1, 1]} : vector<18x64xf32> to vector<16x64xf32>
    %c1 = arith.constant 1 : index
    %c0_5 = arith.constant 0 : index
    %c0_6 = arith.constant 0 : index
    %7 = vector.load %arg2[%c1, %c0_5, %c0_6] : memref<3x64x128xf32, #tpu.memory_space<vmem>>, vector<1x64x128xf32>
    %8 = vector.shape_cast %7 : vector<1x64x128xf32> to vector<64x128xf32>
    %cst_7 = arith.constant dense<0.000000e+00> : vector<16x128xf32>
    %9 = tpu.matmul %6, %8, %cst_7 {dimension_numbers = #tpu.dot_dimension_numbers<[1], [0], [0], [1], [0, 0, 1, 1], [], []>} : vector<16x64xf32>, vector<64x128xf32>, vector<16x128xf32> -> vector<16x128xf32>
    %10 = arith.addf %5, %9 : vector<16x128xf32>
    %11 = vector.extract_strided_slice %1 {offsets = [2, 0], sizes = [16, 64], strides = [1, 1]} : vector<18x64xf32> to vector<16x64xf32>
    %c2 = arith.constant 2 : index
    %c0_8 = arith.constant 0 : index
    %c0_9 = arith.constant 0 : index
    %12 = vector.load %arg2[%c2, %c0_8, %c0_9] : memref<3x64x128xf32, #tpu.memory_space<vmem>>, vector<1x64x128xf32>
    %13 = vector.shape_cast %12 : vector<1x64x128xf32> to vector<64x128xf32>
    %cst_10 = arith.constant dense<0.000000e+00> : vector<16x128xf32>
    %14 = tpu.matmul %11, %13, %cst_10 {dimension_numbers = #tpu.dot_dimension_numbers<[1], [0], [0], [1], [0, 0, 1, 1], [], []>} : vector<16x64xf32>, vector<64x128xf32>, vector<16x128xf32> -> vector<16x128xf32>
    %15 = arith.addf %10, %14 : vector<16x128xf32>
    %c0_11 = arith.constant 0 : index
    %c0_12 = arith.constant 0 : index
    %16 = vector.load %arg3[%c0_11, %c0_12] : memref<1x128xf32, #tpu.memory_space<vmem>>, vector<1x128xf32>
    %17 = vector.broadcast %16 : vector<1x128xf32> to vector<16x128xf32>
    %18 = arith.addf %15, %17 : vector<16x128xf32>
    %cst_13 = arith.constant 0.000000e+00 : f32
    %19 = vector.broadcast %cst_13 : f32 to vector<16x128xf32>
    %20 = arith.maximumf %18, %19 : vector<16x128xf32>
    %cst_14 = arith.constant 0.000000e+00 : f32
    %21 = vector.broadcast %cst_14 : f32 to vector<1x128xf32>
    %22 = tpu.concatenate %21, %20, %21 in 0 : vector<1x128xf32>, vector<16x128xf32>, vector<1x128xf32> -> vector<18x128xf32>
    %23 = vector.extract_strided_slice %22 {offsets = [0, 0], sizes = [16, 128], strides = [1, 1]} : vector<18x128xf32> to vector<16x128xf32>
    %c0_15 = arith.constant 0 : index
    %c0_16 = arith.constant 0 : index
    %c0_17 = arith.constant 0 : index
    %24 = vector.load %arg4[%c0_15, %c0_16, %c0_17] : memref<3x128x128xf32, #tpu.memory_space<vmem>>, vector<1x128x128xf32>
    %25 = vector.shape_cast %24 : vector<1x128x128xf32> to vector<128x128xf32>
    %cst_18 = arith.constant dense<0.000000e+00> : vector<16x128xf32>
    %26 = tpu.matmul %23, %25, %cst_18 {dimension_numbers = #tpu.dot_dimension_numbers<[1], [0], [0], [1], [0, 0, 1, 1], [], []>} : vector<16x128xf32>, vector<128x128xf32>, vector<16x128xf32> -> vector<16x128xf32>
    %27 = vector.extract_strided_slice %22 {offsets = [1, 0], sizes = [16, 128], strides = [1, 1]} : vector<18x128xf32> to vector<16x128xf32>
    %c1_19 = arith.constant 1 : index
    %c0_20 = arith.constant 0 : index
    %c0_21 = arith.constant 0 : index
    %28 = vector.load %arg4[%c1_19, %c0_20, %c0_21] : memref<3x128x128xf32, #tpu.memory_space<vmem>>, vector<1x128x128xf32>
    %29 = vector.shape_cast %28 : vector<1x128x128xf32> to vector<128x128xf32>
    %cst_22 = arith.constant dense<0.000000e+00> : vector<16x128xf32>
    %30 = tpu.matmul %27, %29, %cst_22 {dimension_numbers = #tpu.dot_dimension_numbers<[1], [0], [0], [1], [0, 0, 1, 1], [], []>} : vector<16x128xf32>, vector<128x128xf32>, vector<16x128xf32> -> vector<16x128xf32>
    %31 = arith.addf %26, %30 : vector<16x128xf32>
    %32 = vector.extract_strided_slice %22 {offsets = [2, 0], sizes = [16, 128], strides = [1, 1]} : vector<18x128xf32> to vector<16x128xf32>
    %c2_23 = arith.constant 2 : index
    %c0_24 = arith.constant 0 : index
    %c0_25 = arith.constant 0 : index
    %33 = vector.load %arg4[%c2_23, %c0_24, %c0_25] : memref<3x128x128xf32, #tpu.memory_space<vmem>>, vector<1x128x128xf32>
    %34 = vector.shape_cast %33 : vector<1x128x128xf32> to vector<128x128xf32>
    %cst_26 = arith.constant dense<0.000000e+00> : vector<16x128xf32>
    %35 = tpu.matmul %32, %34, %cst_26 {dimension_numbers = #tpu.dot_dimension_numbers<[1], [0], [0], [1], [0, 0, 1, 1], [], []>} : vector<16x128xf32>, vector<128x128xf32>, vector<16x128xf32> -> vector<16x128xf32>
    %36 = arith.addf %31, %35 : vector<16x128xf32>
    %c0_27 = arith.constant 0 : index
    %c0_28 = arith.constant 0 : index
    %37 = vector.load %arg5[%c0_27, %c0_28] : memref<1x128xf32, #tpu.memory_space<vmem>>, vector<1x128xf32>
    %38 = vector.broadcast %37 : vector<1x128xf32> to vector<16x128xf32>
    %39 = arith.addf %36, %38 : vector<16x128xf32>
    %cst_29 = arith.constant 0.000000e+00 : f32
    %40 = vector.broadcast %cst_29 : f32 to vector<16x128xf32>
    %41 = arith.maximumf %39, %40 : vector<16x128xf32>
    %42 = vector.shape_cast %41 : vector<16x128xf32> to vector<1x16x128xf32>
    %c0_30 = arith.constant 0 : index
    %c0_31 = arith.constant 0 : index
    %c0_32 = arith.constant 0 : index
    %43 = vector.load %arg6[%c0_30, %c0_31, %c0_32] : memref<1x16x128xf32, #tpu.memory_space<vmem>>, vector<1x16x128xf32>
    tpu.vector_store %arg6[%c0_30, %c0_31, %c0_32], %42 {strides = array<i32>} : memref<1x16x128xf32, #tpu.memory_space<vmem>>, vector<1x16x128xf32>,
    return
  }
  func.func @transform_0(%arg0: i32) -> (i32, i32, i32) {
    %c0_i32 = arith.constant 0 : i32
    %c0_i32_0 = arith.constant 0 : i32
    %c0_i32_1 = arith.constant 0 : i32
    return %arg0, %c0_i32, %c0_i32_0 : i32, i32, i32
  }
  func.func @transform_1(%arg0: i32) -> (i32, i32, i32) {
    %c0_i32 = arith.constant 0 : i32
    %c0_i32_0 = arith.constant 0 : i32
    %c0_i32_1 = arith.constant 0 : i32
    %c0_i32_2 = arith.constant 0 : i32
    return %c0_i32, %c0_i32_0, %c0_i32_1 : i32, i32, i32
  }
  func.func @transform_2(%arg0: i32) -> (i32, i32) {
    %c0_i32 = arith.constant 0 : i32
    %c0_i32_0 = arith.constant 0 : i32
    %c0_i32_1 = arith.constant 0 : i32
    return %c0_i32, %c0_i32_0 : i32, i32
  }
  func.func @transform_3(%arg0: i32) -> (i32, i32, i32) {
    %c0_i32 = arith.constant 0 : i32
    %c0_i32_0 = arith.constant 0 : i32
    %c0_i32_1 = arith.constant 0 : i32
    %c0_i32_2 = arith.constant 0 : i32
    return %c0_i32, %c0_i32_0, %c0_i32_1 : i32, i32, i32
  }
  func.func @transform_4(%arg0: i32) -> (i32, i32) {
    %c0_i32 = arith.constant 0 : i32
    %c0_i32_0 = arith.constant 0 : i32
    %c0_i32_1 = arith.constant 0 : i32
    return %c0_i32, %c0_i32_0 : i32, i32
  }
  func.func @transform_5(%arg0: i32) -> (i32, i32, i32) {
    %c0_i32 = arith.constant 0 : i32
    %c0_i32_0 = arith.constant 0 : i32
    %c0_i32_1 = arith.constant 0 : i32
    return %arg0, %c0_i32, %c0_i32_0 : i32, i32, i32
  }
}

</mosaic_0001>

<llo_original>
// kernel: tpu_custom_call.1
$region0: #{tpu_custom_call.1}
  #allocation0 [shape = 'u32[]', space=smem, size = 0x4, offset = 0x4, fixed_abs, tag = 'smem constant byte address 0x4 - core index']
  #allocation1 [shape = 'u32[144,128]{1,0:T(1,128)}', space=vmem, size = 0x12000, scoped, tag = 'internal scratch']
  %s0 = inlined_call_operand.vmem [shape: f32[2,18,64], index: 0, kind: input, shape index: {}]
  %s1 = inlined_call_operand.hbm [shape: f32[3,64,128], index: 1, kind: input, shape index: {}]
  %s2 = inlined_call_operand.vmem [shape: f32[1,128], index: 2, kind: input, shape index: {}]
  %s3 = inlined_call_operand.hbm [shape: f32[3,128,128], index: 3, kind: input, shape index: {}]
  %s4 = inlined_call_operand.vmem [shape: f32[1,128], index: 4, kind: input, shape index: {}]
  %s5 = inlined_call_operand.hbm [shape: f32[2,16,128], index: 5, kind: output, shape index: {}]
  %s6 = sld [smem:[#allocation0]]
  $region61: #{tpu_custom_call.1} parent=0
    _
  %s8 = ssub.s32 1, %s6
  %s9 = scalar_select 0, %s8, %s6
  $region1: #{tpu_custom_call.1} parent=0
    #allocation2 [shape = 'u8[98304]{0}', space=vmem, size = 0x18000, scoped, tag = 'input window, operand 1, single buffered']
    #allocation3 [shape = 's32[2]{0}', space=sflag, size = 0x8, scoped, tag = 'scoped memory for tpu_custom_call.1']
    #allocation4 [shape = 's32[2]{0}', space=sflag, size = 0x8, scoped, tag = 'scoped memory for tpu_custom_call.1']
    #allocation5 [shape = 'u8[196608]{0}', space=vmem, size = 0x30000, scoped, tag = 'input window, operand 3, single buffered']
    #allocation6 [shape = 's32[1]{0}', space=sflag, size = 0x4, scoped, tag = 'scoped memory for tpu_custom_call.1']
    #allocation7 [shape = 'u8[16384]{0}', space=vmem, size = 0x4000, scoped, tag = 'output window, operand 0']
    %10 = vsyncpa [#allocation3], 0
    %11 = vsyncpa [#allocation6], 0
    %12 = vsyncpa [#allocation4], 0
    %s13 = scalar_lea.sflag [#allocation4], 1
    %14 = vsyncpa %s13, 0
    loop: start=0, step=1, limit=4
    $region2: #{tpu_custom_call.1} parent=1 // loop_pre_header
      _
    $region3: #{tpu_custom_call.1} parent=1 // loop_header
      %s16 = sphi 0, %s20
      %p17 = scmp.ge.s32.totalorder %s16, 4
      %s26 = sphi 0, %s28
      %s29 = sphi 0, %s26
      %s30 = sphi 0, %s29
      %s46 = sphi 0, %s30
      %s50 = sphi 0, %s50
      %s52 = sphi 0, %s50
      %s53 = sphi 0, %s52
      %s67 = sphi 0, %s53
      %s71 = sphi 0, %s71
      %s73 = sphi 0, %s71
      %s74 = sphi 0, %s73
      %s88 = sphi 0, %s74
      %s92 = sphi 0, %s92
      %s94 = sphi 0, %s92
      %s95 = sphi 0, %s94
      %s109 = sphi 0, %s95
      %s113 = sphi 0, %s113
      %s115 = sphi 0, %s113
      %s116 = sphi 0, %s115
      %s130 = sphi 0, %s116
      %s136 = sphi 0, %s138
      %s139 = sphi 0, %s136
      %s140 = sphi 0, %s139
      %s156 = sphi 0, %s140
    $region4: #{tpu_custom_call.1} parent=1 // loop_header_branch
      %19 = sbr.rel (%p17) target = $region8
    $region5: #{tpu_custom_call.1} parent=1 // loop_body
      %s21 = ssub.s32 %s16, 1
      %s22 = ssub.s32 %s16, 2
      %s23 = sadd.s32 %s16, 1
      %s24 = ssub.s32 %s16, %s23
      %p25 = scmp.eq.s32.totalorder %s24, 0
      %s27 = sadd.s32 %s26, 1
      %s28 = scalar_select %p25, %s26, %s27
      %p31 = pneg %p25
      %p32 = scmp.eq.s32.totalorder %s16, 1
      %p33 = por %p31, %p32
      %p34 = scmp.ne.s32.totalorder %s26, %s29
      %p35 = scmp.eq.s32.totalorder %s16, 0
      %p36 = por %p34, %p35
      %p37 = scmp.ne.s32.totalorder %s26, %s29
      %p38 = scmp.eq.s32.totalorder %s21, 1
      %p39 = por %p37, %p38
      %p40 = scmp.ne.s32.totalorder %s29, %s30
      %p41 = scmp.eq.s32.totalorder %s21, 0
      %p42 = por %p40, %p41
      %p43 = scmp.ne.s32.totalorder %s29, %s30
      %p44 = scmp.eq.s32.totalorder %s22, 1
      %p45 = por %p43, %p44
      %p47 = scmp.ne.s32.totalorder %s30, %s46
      %p48 = scmp.eq.s32.totalorder %s22, 0
      %p49 = por %p47, %p48
      %s51 = sadd.s32 %s50, 1
      %p54 = scmp.eq.s32.totalorder %s16, 1
      %p55 = scmp.ne.s32.totalorder %s50, %s52
      %p56 = scmp.eq.s32.totalorder %s16, 0
      %p57 = por %p55, %p56
      %p58 = scmp.ne.s32.totalorder %s50, %s52
      %p59 = scmp.eq.s32.totalorder %s21, 1
      %p60 = por %p58, %p59
      %p61 = scmp.ne.s32.totalorder %s52, %s53
      %p62 = scmp.eq.s32.totalorder %s21, 0
      %p63 = por %p61, %p62
      %p64 = scmp.ne.s32.totalorder %s52, %s53
      %p65 = scmp.eq.s32.totalorder %s22, 1
      %p66 = por %p64, %p65
      %p68 = scmp.ne.s32.totalorder %s53, %s67
      %p69 = scmp.eq.s32.totalorder %s22, 0
      %p70 = por %p68, %p69
      %s72 = sadd.s32 %s71, 1
      %p75 = scmp.eq.s32.totalorder %s16, 1
      %p76 = scmp.ne.s32.totalorder %s71, %s73
      %p77 = scmp.eq.s32.totalorder %s16, 0
      %p78 = por %p76, %p77
      %p79 = scmp.ne.s32.totalorder %s71, %s73
      %p80 = scmp.eq.s32.totalorder %s21, 1
      %p81 = por %p79, %p80
      %p82 = scmp.ne.s32.totalorder %s73, %s74
      %p83 = scmp.eq.s32.totalorder %s21, 0
      %p84 = por %p82, %p83
      %p85 = scmp.ne.s32.totalorder %s73, %s74
      %p86 = scmp.eq.s32.totalorder %s22, 1
      %p87 = por %p85, %p86
      %p89 = scmp.ne.s32.totalorder %s74, %s88
      %p90 = scmp.eq.s32.totalorder %s22, 0
      %p91 = por %p89, %p90
      %s93 = sadd.s32 %s92, 1
      %p96 = scmp.eq.s32.totalorder %s16, 1
      %p97 = scmp.ne.s32.totalorder %s92, %s94
      %p98 = scmp.eq.s32.totalorder %s16, 0
      %p99 = por %p97, %p98
      %p100 = scmp.ne.s32.totalorder %s92, %s94
      %p101 = scmp.eq.s32.totalorder %s21, 1
      %p102 = por %p100, %p101
      %p103 = scmp.ne.s32.totalorder %s94, %s95
      %p104 = scmp.eq.s32.totalorder %s21, 0
      %p105 = por %p103, %p104
      %p106 = scmp.ne.s32.totalorder %s94, %s95
      %p107 = scmp.eq.s32.totalorder %s22, 1
      %p108 = por %p106, %p107
      %p110 = scmp.ne.s32.totalorder %s95, %s109
      %p111 = scmp.eq.s32.totalorder %s22, 0
      %p112 = por %p110, %p111
      %s114 = sadd.s32 %s113, 1
      %p117 = scmp.eq.s32.totalorder %s16, 1
      %p118 = scmp.ne.s32.totalorder %s113, %s115
      %p119 = scmp.eq.s32.totalorder %s16, 0
      %p120 = por %p118, %p119
      %p121 = scmp.ne.s32.totalorder %s113, %s115
      %p122 = scmp.eq.s32.totalorder %s21, 1
      %p123 = por %p121, %p122
      %p124 = scmp.ne.s32.totalorder %s115, %s116
      %p125 = scmp.eq.s32.totalorder %s21, 0
      %p126 = por %p124, %p125
      %p127 = scmp.ne.s32.totalorder %s115, %s116
      %p128 = scmp.eq.s32.totalorder %s22, 1
      %p129 = por %p127, %p128
      %p131 = scmp.ne.s32.totalorder %s116, %s130
      %p132 = scmp.eq.s32.totalorder %s22, 0
      %p133 = por %p131, %p132
      %s134 = ssub.s32 %s16, %s23
      %p135 = scmp.eq.s32.totalorder %s134, 0
      %s137 = sadd.s32 %s136, 1
      %s138 = scalar_select %p135, %s136, %s137
      %p141 = pneg %p135
      %p142 = scmp.eq.s32.totalorder %s16, 1
      %p143 = por %p141, %p142
      %p144 = scmp.ne.s32.totalorder %s136, %s139
      %p145 = scmp.eq.s32.totalorder %s16, 0
      %p146 = por %p144, %p145
      %p147 = scmp.ne.s32.totalorder %s136, %s139
      %p148 = scmp.eq.s32.totalorder %s21, 1
      %p149 = por %p147, %p148
      %p150 = scmp.ne.s32.totalorder %s139, %s140
      %p151 = scmp.eq.s32.totalorder %s21, 0
      %p152 = por %p150, %p151
      %p153 = scmp.ne.s32.totalorder %s139, %s140
      %p154 = scmp.eq.s32.totalorder %s22, 1
      %p155 = por %p153, %p154
      %p157 = scmp.ne.s32.totalorder %s140, %s156
      %p158 = scmp.eq.s32.totalorder %s22, 0
      %p159 = por %p157, %p158
      %p160 = scmp.le.s32.totalorder 1, %s16
      %p161 = scmp.lt.s32.totalorder %s16, 3
      %p162 = pnand %p160, %p161
      %p163 = pneg %p162
      // Predicated region
      $region9: #{tpu_custom_call.1} parent=5 // pred_check
        _
      $region10: #{tpu_custom_call.1} parent=5 // pred_check_branch
        %165 = sbr.rel (%p162) target = $region12
      $region11: #{tpu_custom_call.1} parent=5 // pred_region
        %s166 = ssub.s32 %s16, 1
        // Predicated region
        $region13: #{tpu_custom_call.1} parent=11 // pred_check
          %p167 = pneg %p63
        $region14: #{tpu_custom_call.1} parent=11 // pred_check_branch
          %169 = sbr.rel (%p167) target = $region16
        $region15: #{tpu_custom_call.1} parent=11 // pred_region
          %s171 = ssub.s32 3072, 3072
          %172 = vsyncadd [#allocation3], %s171
          %s173 = sshll.u32 [#allocation2], 4
          %s174 = int_to_ptr.vmem [resolvable:$true] %s173
          %179 = dma.hbm_to_vmem [thread:$0]  %s1, 3072, %s174, [#allocation3], 128, 128, 8
        $region16: #{tpu_custom_call.1} parent=11 // pred_fallthru
          _
        // Predicated region
        $region17: #{tpu_custom_call.1} parent=11 // pred_check
          %p180 = pneg %p84
        $region18: #{tpu_custom_call.1} parent=11 // pred_check_branch
          %182 = sbr.rel (%p180) target = $region20
        $region19: #{tpu_custom_call.1} parent=11 // pred_region
          _
        $region20: #{tpu_custom_call.1} parent=11 // pred_fallthru
          _
        // Predicated region
        $region21: #{tpu_custom_call.1} parent=11 // pred_check
          %p183 = pneg %p105
        $region22: #{tpu_custom_call.1} parent=11 // pred_check_branch
          %185 = sbr.rel (%p183) target = $region24
        $region23: #{tpu_custom_call.1} parent=11 // pred_region
          %s187 = ssub.s32 6144, 6144
          %188 = vsyncadd [#allocation6], %s187
          %s189 = sshll.u32 [#allocation5], 4
          %s190 = int_to_ptr.vmem [resolvable:$true] %s189
          %195 = dma.hbm_to_vmem [thread:$0]  %s3, 6144, %s190, [#allocation6], 128, 128, 8
        $region24: #{tpu_custom_call.1} parent=11 // pred_fallthru
          _
        // Predicated region
        $region25: #{tpu_custom_call.1} parent=11 // pred_check
          %p196 = pneg %p126
        $region26: #{tpu_custom_call.1} parent=11 // pred_check_branch
          %198 = sbr.rel (%p196) target = $region28
        $region27: #{tpu_custom_call.1} parent=11 // pred_region
          _
        $region28: #{tpu_custom_call.1} parent=11 // pred_fallthru
          _
      $region12: #{tpu_custom_call.1} parent=5 // pred_fallthru
        _
      %p199 = scmp.lt.s32.totalorder %s16, 2
      // Predicated region
      $region29: #{tpu_custom_call.1} parent=5 // pred_check
        %p200 = pneg %p199
      $region30: #{tpu_custom_call.1} parent=5 // pred_check_branch
        %202 = sbr.rel (%p200) target = $region32
      $region31: #{tpu_custom_call.1} parent=5 // pred_region
        // Predicated region
        $region33: #{tpu_custom_call.1} parent=31 // pred_check
          %p203 = pneg %p36
        $region34: #{tpu_custom_call.1} parent=31 // pred_check_branch
          %205 = sbr.rel (%p203) target = $region36
        $region35: #{tpu_custom_call.1} parent=31 // pred_region
          %p206 = scmp.lt.s32.totalorder %s16, 1
          %s207 = scalar_select %p206, %s16, 1
          %s208 = smul.addr %s207, 3
          %s209 = smul.addr %s208, 8
          %s210 = scalar_lea.vmem %s0, %s209
        $region36: #{tpu_custom_call.1} parent=31 // pred_fallthru
          _
      $region32: #{tpu_custom_call.1} parent=5 // pred_fallthru
        _
      %p211 = scmp.le.s32.totalorder 1, %s16
      %p212 = scmp.lt.s32.totalorder %s16, 3
      %p213 = pnand %p211, %p212
      %p214 = pneg %p213
      // Predicated region
      $region37: #{tpu_custom_call.1} parent=5 // pred_check
        _
      $region38: #{tpu_custom_call.1} parent=5 // pred_check_branch
        %216 = sbr.rel (%p213) target = $region40
      $region39: #{tpu_custom_call.1} parent=5 // pred_region
        %s217 = ssub.s32 %s16, 1
        // Predicated region
        $region41: #{tpu_custom_call.1} parent=39 // pred_check
          %p218 = pneg %p63
        $region42: #{tpu_custom_call.1} parent=39 // pred_check_branch
          %220 = sbr.rel (%p218) target = $region44
        $region43: #{tpu_custom_call.1} parent=39 // pred_region
          %221 = dma.done [#allocation3], 3072
        $region44: #{tpu_custom_call.1} parent=39 // pred_fallthru
          _
        // Predicated region
        $region45: #{tpu_custom_call.1} parent=39 // pred_check
          %p222 = pneg %p105
        $region46: #{tpu_custom_call.1} parent=39 // pred_check_branch
          %224 = sbr.rel (%p222) target = $region48
        $region47: #{tpu_custom_call.1} parent=39 // pred_region
          %225 = dma.done [#allocation6], 6144
        $region48: #{tpu_custom_call.1} parent=39 // pred_fallthru
          _
        %p226 = scmp.lt.s32.totalorder %s21, 1
        %s227 = scalar_select %p226, %s21, 1
        %s228 = smul.addr %s227, 3
        %s229 = smul.addr %s228, 8
        %s230 = scalar_lea.vmem %s0, %s229
        %p231 = pneg %p42
        %p232 = pneg %p39
        %p233 = pneg %p63
        %p234 = pneg %p60
        %p235 = pneg %p84
        %p236 = pneg %p81
        %p237 = pneg %p105
        %p238 = pneg %p102
        %p239 = pneg %p126
        %p240 = pneg %p123
        %p241 = pneg %p152
        %p242 = pneg %p149
        %s243 = sand.u32 %s139, 1
        %s244 = scalar_lea.sflag [#allocation4], %s243
        %s245 = sand.u32 %s139, 1
        %s246 = smul.addr %s245, 16
        %s247 = scalar_lea.vmem [#allocation7], %s246
        %p248 = scmp.lt.s32.totalorder %s21, 1
        %s249 = scalar_select %p248, %s21, 1
        %s250 = smul.addr %s249, 3
        %s251 = smul.addr %s250, 8
        %s252 = scalar_lea.vmem %s0, %s251
        %v253 = vld [vmem:[%s252] sm:$0xff]
        %v254 = vld [vmem:[%s252 + $0x8] sm:$0xff]
        %v255 = vld [vmem:[%s252 + $0x10] sm:$0x3]
        %v256 = vld [vmem:[#allocation2] sm:$0xff]
        %v257 = vld [vmem:[#allocation2 + $0x8] sm:$0xff]
        %v258 = vld [vmem:[#allocation2 + $0x10] sm:$0xff]
        %v259 = vld [vmem:[#allocation2 + $0x18] sm:$0xff]
        %v260 = vld [vmem:[#allocation2 + $0x20] sm:$0xff]
        %v261 = vld [vmem:[#allocation2 + $0x28] sm:$0xff]
        %v262 = vld [vmem:[#allocation2 + $0x30] sm:$0xff]
        %v263 = vld [vmem:[#allocation2 + $0x38] sm:$0xff]
        %s264 = scalar_lea.vmem [#allocation2], 64
        %v265 = vld [vmem:[%s264] sm:$0xff]
        %v266 = vld [vmem:[%s264 + $0x8] sm:$0xff]
        %v267 = vld [vmem:[%s264 + $0x10] sm:$0xff]
        %v268 = vld [vmem:[%s264 + $0x18] sm:$0xff]
        %v269 = vld [vmem:[%s264 + $0x20] sm:$0xff]
        %v270 = vld [vmem:[%s264 + $0x28] sm:$0xff]
        %v271 = vld [vmem:[%s264 + $0x30] sm:$0xff]
        %v272 = vld [vmem:[%s264 + $0x38] sm:$0xff]
        %vm276 = vcmask 1046528
        %v277 = vrot.slane %v253, 1
        %v278 = vrot.slane %v254, 1
        %v279 = vsel %vm276, %v277, %v278
        %v280 = vrot.slane %v255, 1
        %v281 = vsel %vm276, %v278, %v280
        %vm282 = vcmask 523264
        %v283 = vsel %vm282, %v279, 0
        %v285 = vsel %vm282, %v281, 0
        %287 = vmatprep.subr.mxu0 0.0
        %288 = vmatpush1.msra.mxu0 0.0
        %289 = vmatprep.subr.mxu0 0.0
        %290 = vmatpush1.msra.mxu0 0.0
        %291 = vmatprep.subr.mxu0 0.0
        %292 = vmatpush1.msra.mxu0 0.0
        %293 = vmatprep.subr.mxu0 0.0
        %294 = vmatpush1.msra.mxu0 0.0
        %295 = vmatprep.subr.mxu0 0.0
        %296 = vmatpush1.msra.mxu0 0.0
        %297 = vmatprep.subr.mxu0 0.0
        %298 = vmatpush1.msra.mxu0 0.0
        %299 = vmatprep.subr.mxu0 0.0
        %300 = vmatpush1.msra.mxu0 0.0
        %301 = vmatprep.subr.mxu0 0.0
        %302 = vmatpush1.msra.mxu0 0.0
        %303 = vmatprep.subr.mxu0 0.0
        %304 = vmatpush1.msra.mxu0 %v272
        %305 = vmatprep.subr.mxu0 0.0
        %306 = vmatpush1.msra.mxu0 %v271
        %307 = vmatprep.subr.mxu0 0.0
        %308 = vmatpush1.msra.mxu0 %v270
        %309 = vmatprep.subr.mxu0 0.0
        %310 = vmatpush1.msra.mxu0 %v269
        %311 = vmatprep.subr.mxu0 0.0
        %312 = vmatpush1.msra.mxu0 %v268
        %313 = vmatprep.subr.mxu0 0.0
        %314 = vmatpush1.msra.mxu0 %v267
        %315 = vmatprep.subr.mxu0 0.0
        %316 = vmatpush1.msra.mxu0 %v266
        %317 = vmatprep.subr.mxu0 0.0
        %318 = vmatpush1.msra.mxu0 %v265
        %319 = vmatprep.subr.mxu0 0.0
        %320 = vmatpush2.msra.mxu0 0.0
        %321 = vmatprep.subr.mxu0 0.0
        %322 = vmatpush2.msra.mxu0 0.0
        %323 = vmatprep.subr.mxu0 0.0
        %324 = vmatpush2.msra.mxu0 0.0
        %325 = vmatprep.subr.mxu0 0.0
        %326 = vmatpush2.msra.mxu0 0.0
        %327 = vmatprep.subr.mxu0 0.0
        %328 = vmatpush2.msra.mxu0 0.0
        %329 = vmatprep.subr.mxu0 0.0
        %330 = vmatpush2.msra.mxu0 0.0
        %331 = vmatprep.subr.mxu0 0.0
        %332 = vmatpush2.msra.mxu0 0.0
        %333 = vmatprep.subr.mxu0 0.0
        %334 = vmatpush2.msra.mxu0 0.0
        %335 = vmatprep.subr.mxu0 0.0
        %336 = vmatpush2.msra.mxu0 0.0
        %337 = vmatprep.subr.mxu0 0.0
        %338 = vmatpush2.msra.mxu0 0.0
        %339 = vmatprep.subr.mxu0 0.0
        %340 = vmatpush2.msra.mxu0 0.0
        %341 = vmatprep.subr.mxu0 0.0
        %342 = vmatpush2.msra.mxu0 0.0
        %343 = vmatprep.subr.mxu0 0.0
        %344 = vmatpush2.msra.mxu0 0.0
        %345 = vmatprep.subr.mxu0 0.0
        %346 = vmatpush2.msra.mxu0 0.0
        %347 = vmatprep.subr.mxu0 0.0
        %348 = vmatpush2.msra.mxu0 0.0
        %349 = vmatprep.subr.mxu0 0.0
        %350 = vmatpush2.msra.mxu0 0.0
        %351 = vmatprep.mubr.f32.mxu0 0.0
        %352 = vmatmul.mubr.f32.gmra.mxu0 %v283
        %v353 = vpop.f32.mrf.mxu0
        %v354 = vadd.f32 0.0, %v353
        %v355 = vpop.f32.mrf.mxu0
        %356 = vmatprep.mubr.f32.mxu0 0.0
        %357 = vmatmul.mubr.f32.gmra.mxu0 %v285
        %v358 = vpop.f32.mrf.mxu0
        %v359 = vadd.f32 0.0, %v358
        %v360 = vpop.f32.mrf.mxu0
        %361 = vdwg.mxu0
        %v362 = vsel %vm282, %v253, 0
        %v364 = vsel %vm282, %v254, 0
        %366 = vmatprep.subr.mxu0 0.0
        %367 = vmatpush1.msra.mxu0 0.0
        %368 = vmatprep.subr.mxu0 0.0
        %369 = vmatpush1.msra.mxu0 0.0
        %370 = vmatprep.subr.mxu0 0.0
        %371 = vmatpush1.msra.mxu0 0.0
        %372 = vmatprep.subr.mxu0 0.0
        %373 = vmatpush1.msra.mxu0 0.0
        %374 = vmatprep.subr.mxu0 0.0
        %375 = vmatpush1.msra.mxu0 0.0
        %376 = vmatprep.subr.mxu0 0.0
        %377 = vmatpush1.msra.mxu0 0.0
        %378 = vmatprep.subr.mxu0 0.0
        %379 = vmatpush1.msra.mxu0 0.0
        %380 = vmatprep.subr.mxu0 0.0
        %381 = vmatpush1.msra.mxu0 0.0
        %382 = vmatprep.subr.mxu0 0.0
        %383 = vmatpush1.msra.mxu0 %v263
        %384 = vmatprep.subr.mxu0 0.0
        %385 = vmatpush1.msra.mxu0 %v262
        %386 = vmatprep.subr.mxu0 0.0
        %387 = vmatpush1.msra.mxu0 %v261
        %388 = vmatprep.subr.mxu0 0.0
        %389 = vmatpush1.msra.mxu0 %v260
        %390 = vmatprep.subr.mxu0 0.0
        %391 = vmatpush1.msra.mxu0 %v259
        %392 = vmatprep.subr.mxu0 0.0
        %393 = vmatpush1.msra.mxu0 %v258
        %394 = vmatprep.subr.mxu0 0.0
        %395 = vmatpush1.msra.mxu0 %v257
        %396 = vmatprep.subr.mxu0 0.0
        %397 = vmatpush1.msra.mxu0 %v256
        %398 = vmatprep.subr.mxu0 0.0
        %399 = vmatpush2.msra.mxu0 0.0
        %400 = vmatprep.subr.mxu0 0.0
        %401 = vmatpush2.msra.mxu0 0.0
        %402 = vmatprep.subr.mxu0 0.0
        %403 = vmatpush2.msra.mxu0 0.0
        %404 = vmatprep.subr.mxu0 0.0
        %405 = vmatpush2.msra.mxu0 0.0
        %406 = vmatprep.subr.mxu0 0.0
        %407 = vmatpush2.msra.mxu0 0.0
        %408 = vmatprep.subr.mxu0 0.0
        %409 = vmatpush2.msra.mxu0 0.0
        %410 = vmatprep.subr.mxu0 0.0
        %411 = vmatpush2.msra.mxu0 0.0
        %412 = vmatprep.subr.mxu0 0.0
        %413 = vmatpush2.msra.mxu0 0.0
        %414 = vmatprep.subr.mxu0 0.0
        %415 = vmatpush2.msra.mxu0 0.0
        %416 = vmatprep.subr.mxu0 0.0
        %417 = vmatpush2.msra.mxu0 0.0
        %418 = vmatprep.subr.mxu0 0.0
        %419 = vmatpush2.msra.mxu0 0.0
        %420 = vmatprep.subr.mxu0 0.0
        %421 = vmatpush2.msra.mxu0 0.0
        %422 = vmatprep.subr.mxu0 0.0
        %423 = vmatpush2.msra.mxu0 0.0
        %424 = vmatprep.subr.mxu0 0.0
        %425 = vmatpush2.msra.mxu0 0.0
        %426 = vmatprep.subr.mxu0 0.0
        %427 = vmatpush2.msra.mxu0 0.0
        %428 = vmatprep.subr.mxu0 0.0
        %429 = vmatpush2.msra.mxu0 0.0
        %430 = vmatprep.mubr.f32.mxu0 0.0
        %431 = vmatmul.mubr.f32.gmra.mxu0 %v362
        %v432 = vpop.f32.mrf.mxu0
        %v433 = vadd.f32 %v354, %v432
        %v434 = vpop.f32.mrf.mxu0
        %435 = vmatprep.mubr.f32.mxu0 0.0
        %436 = vmatmul.mubr.f32.gmra.mxu0 %v364
        %v437 = vpop.f32.mrf.mxu0
        %v438 = vadd.f32 %v359, %v437
        %v439 = vpop.f32.mrf.mxu0
        %440 = vdwg.mxu0
        %s441 = scalar_lea.vmem [#allocation2], 128
        %v442 = vld [vmem:[%s441] sm:$0xff]
        %v443 = vld [vmem:[%s441 + $0x8] sm:$0xff]
        %v444 = vld [vmem:[%s441 + $0x10] sm:$0xff]
        %v445 = vld [vmem:[%s441 + $0x18] sm:$0xff]
        %v446 = vld [vmem:[%s441 + $0x20] sm:$0xff]
        %v447 = vld [vmem:[%s441 + $0x28] sm:$0xff]
        %v448 = vld [vmem:[%s441 + $0x30] sm:$0xff]
        %v449 = vld [vmem:[%s441 + $0x38] sm:$0xff]
        %vm450 = vcmask 1045504
        %v451 = vrot.slane %v253, 2
        %v452 = vrot.slane %v254, 2
        %v453 = vsel %vm450, %v451, %v452
        %v454 = vrot.slane %v255, 2
        %v455 = vsel %vm450, %v452, %v454
        %v456 = vsel %vm282, %v453, 0
        %v458 = vsel %vm282, %v455, 0
        %460 = vmatprep.subr.mxu0 0.0
        %461 = vmatpush1.msra.mxu0 0.0
        %462 = vmatprep.subr.mxu0 0.0
        %463 = vmatpush1.msra.mxu0 0.0
        %464 = vmatprep.subr.mxu0 0.0
        %465 = vmatpush1.msra.mxu0 0.0
        %466 = vmatprep.subr.mxu0 0.0
        %467 = vmatpush1.msra.mxu0 0.0
        %468 = vmatprep.subr.mxu0 0.0
        %469 = vmatpush1.msra.mxu0 0.0
        %470 = vmatprep.subr.mxu0 0.0
        %471 = vmatpush1.msra.mxu0 0.0
        %472 = vmatprep.subr.mxu0 0.0
        %473 = vmatpush1.msra.mxu0 0.0
        %474 = vmatprep.subr.mxu0 0.0
        %475 = vmatpush1.msra.mxu0 0.0
        %476 = vmatprep.subr.mxu0 0.0
        %477 = vmatpush1.msra.mxu0 %v449
        %478 = vmatprep.subr.mxu0 0.0
        %479 = vmatpush1.msra.mxu0 %v448
        %480 = vmatprep.subr.mxu0 0.0
        %481 = vmatpush1.msra.mxu0 %v447
        %482 = vmatprep.subr.mxu0 0.0
        %483 = vmatpush1.msra.mxu0 %v446
        %484 = vmatprep.subr.mxu0 0.0
        %485 = vmatpush1.msra.mxu0 %v445
        %486 = vmatprep.subr.mxu0 0.0
        %487 = vmatpush1.msra.mxu0 %v444
        %488 = vmatprep.subr.mxu0 0.0
        %489 = vmatpush1.msra.mxu0 %v443
        %490 = vmatprep.subr.mxu0 0.0
        %491 = vmatpush1.msra.mxu0 %v442
        %492 = vmatprep.subr.mxu0 0.0
        %493 = vmatpush2.msra.mxu0 0.0
        %494 = vmatprep.subr.mxu0 0.0
        %495 = vmatpush2.msra.mxu0 0.0
        %496 = vmatprep.subr.mxu0 0.0
        %497 = vmatpush2.msra.mxu0 0.0
        %498 = vmatprep.subr.mxu0 0.0
        %499 = vmatpush2.msra.mxu0 0.0
        %500 = vmatprep.subr.mxu0 0.0
        %501 = vmatpush2.msra.mxu0 0.0
        %502 = vmatprep.subr.mxu0 0.0
        %503 = vmatpush2.msra.mxu0 0.0
        %504 = vmatprep.subr.mxu0 0.0
        %505 = vmatpush2.msra.mxu0 0.0
        %506 = vmatprep.subr.mxu0 0.0
        %507 = vmatpush2.msra.mxu0 0.0
        %508 = vmatprep.subr.mxu0 0.0
        %509 = vmatpush2.msra.mxu0 0.0
        %510 = vmatprep.subr.mxu0 0.0
        %511 = vmatpush2.msra.mxu0 0.0
        %512 = vmatprep.subr.mxu0 0.0
        %513 = vmatpush2.msra.mxu0 0.0
        %514 = vmatprep.subr.mxu0 0.0
        %515 = vmatpush2.msra.mxu0 0.0
        %516 = vmatprep.subr.mxu0 0.0
        %517 = vmatpush2.msra.mxu0 0.0
        %518 = vmatprep.subr.mxu0 0.0
        %519 = vmatpush2.msra.mxu0 0.0
        %520 = vmatprep.subr.mxu0 0.0
        %521 = vmatpush2.msra.mxu0 0.0
        %522 = vmatprep.subr.mxu0 0.0
        %523 = vmatpush2.msra.mxu0 0.0
        %524 = vmatprep.mubr.f32.mxu0 0.0
        %525 = vmatmul.mubr.f32.gmra.mxu0 %v456
        %v526 = vpop.f32.mrf.mxu0
        %v527 = vadd.f32 0.0, %v526
        %v528 = vpop.f32.mrf.mxu0
        %529 = vmatprep.mubr.f32.mxu0 0.0
        %530 = vmatmul.mubr.f32.gmra.mxu0 %v458
        %v531 = vpop.f32.mrf.mxu0
        %v532 = vadd.f32 0.0, %v531
        %v533 = vpop.f32.mrf.mxu0
        %534 = vdwg.mxu0
        %v535 = vadd.f32 %v433, %v527
        %v536 = vadd.f32 %v438, %v532
        %v537 = vld [vmem:[%s2] sm:$0x1]
        %v539 = vlaneseq
        %v540 = vshrl.u32 %v539, 7
        %v541 = vsub.s32 0, %v540
        %v542 = vrot.slane %v537, %v541
        %v544 = vadd.f32 %v535, %v542
        %v545 = vadd.f32 %v536, %v542
        %v546 = vmax.f32 %v544, 0.0
        %v547 = vmax.f32 %v545, 0.0
        %vm550 = vcmask 1040384
        %v551 = vrot.slane %v546, 7
        %v552 = vrot.slane %v547, 7
        %v553 = vsel %vm550, %v551, %v552
        %v557 = vsel %vm550, 0.0, %v551
        %v558 = vsel %vm550, %v552, 0.0
        %v559 = vld [vmem:[#allocation5] sm:$0xff]
        %v560 = vld [vmem:[#allocation5 + $0x8] sm:$0xff]
        %v561 = vld [vmem:[#allocation5 + $0x10] sm:$0xff]
        %v562 = vld [vmem:[#allocation5 + $0x18] sm:$0xff]
        %v563 = vld [vmem:[#allocation5 + $0x20] sm:$0xff]
        %v564 = vld [vmem:[#allocation5 + $0x28] sm:$0xff]
        %v565 = vld [vmem:[#allocation5 + $0x30] sm:$0xff]
        %v566 = vld [vmem:[#allocation5 + $0x38] sm:$0xff]
        %v567 = vld [vmem:[#allocation5 + $0x40] sm:$0xff]
        %v568 = vld [vmem:[#allocation5 + $0x48] sm:$0xff]
        %v569 = vld [vmem:[#allocation5 + $0x50] sm:$0xff]
        %v570 = vld [vmem:[#allocation5 + $0x58] sm:$0xff]
        %v571 = vld [vmem:[#allocation5 + $0x60] sm:$0xff]
        %v572 = vld [vmem:[#allocation5 + $0x68] sm:$0xff]
        %v573 = vld [vmem:[#allocation5 + $0x70] sm:$0xff]
        %v574 = vld [vmem:[#allocation5 + $0x78] sm:$0xff]
        %s575 = scalar_lea.vmem [#allocation5], 128
        %v576 = vld [vmem:[%s575] sm:$0xff]
        %v577 = vld [vmem:[%s575 + $0x8] sm:$0xff]
        %v578 = vld [vmem:[%s575 + $0x10] sm:$0xff]
        %v579 = vld [vmem:[%s575 + $0x18] sm:$0xff]
        %v580 = vld [vmem:[%s575 + $0x20] sm:$0xff]
        %v581 = vld [vmem:[%s575 + $0x28] sm:$0xff]
        %v582 = vld [vmem:[%s575 + $0x30] sm:$0xff]
        %v583 = vld [vmem:[%s575 + $0x38] sm:$0xff]
        %v584 = vld [vmem:[%s575 + $0x40] sm:$0xff]
        %v585 = vld [vmem:[%s575 + $0x48] sm:$0xff]
        %v586 = vld [vmem:[%s575 + $0x50] sm:$0xff]
        %v587 = vld [vmem:[%s575 + $0x58] sm:$0xff]
        %v588 = vld [vmem:[%s575 + $0x60] sm:$0xff]
        %v589 = vld [vmem:[%s575 + $0x68] sm:$0xff]
        %v590 = vld [vmem:[%s575 + $0x70] sm:$0xff]
        %v591 = vld [vmem:[%s575 + $0x78] sm:$0xff]
        %v594 = vrot.slane %v557, 1
        %v595 = vrot.slane %v553, 1
        %v596 = vsel %vm276, %v594, %v595
        %v597 = vrot.slane %v558, 1
        %v598 = vsel %vm276, %v595, %v597
        %601 = vmatprep.subr.mxu0 0.0
        %602 = vmatpush1.msra.mxu0 %v591
        %603 = vmatprep.subr.mxu0 0.0
        %604 = vmatpush1.msra.mxu0 %v590
        %605 = vmatprep.subr.mxu0 0.0
        %606 = vmatpush1.msra.mxu0 %v589
        %607 = vmatprep.subr.mxu0 0.0
        %608 = vmatpush1.msra.mxu0 %v588
        %609 = vmatprep.subr.mxu0 0.0
        %610 = vmatpush1.msra.mxu0 %v587
        %611 = vmatprep.subr.mxu0 0.0
        %612 = vmatpush1.msra.mxu0 %v586
        %613 = vmatprep.subr.mxu0 0.0
        %614 = vmatpush1.msra.mxu0 %v585
        %615 = vmatprep.subr.mxu0 0.0
        %616 = vmatpush1.msra.mxu0 %v584
        %617 = vmatprep.subr.mxu0 0.0
        %618 = vmatpush1.msra.mxu0 %v583
        %619 = vmatprep.subr.mxu0 0.0
        %620 = vmatpush1.msra.mxu0 %v582
        %621 = vmatprep.subr.mxu0 0.0
        %622 = vmatpush1.msra.mxu0 %v581
        %623 = vmatprep.subr.mxu0 0.0
        %624 = vmatpush1.msra.mxu0 %v580
        %625 = vmatprep.subr.mxu0 0.0
        %626 = vmatpush1.msra.mxu0 %v579
        %627 = vmatprep.subr.mxu0 0.0
        %628 = vmatpush1.msra.mxu0 %v578
        %629 = vmatprep.subr.mxu0 0.0
        %630 = vmatpush1.msra.mxu0 %v577
        %631 = vmatprep.subr.mxu0 0.0
        %632 = vmatpush1.msra.mxu0 %v576
        %633 = vmatprep.subr.mxu0 0.0
        %634 = vmatpush2.msra.mxu0 0.0
        %635 = vmatprep.subr.mxu0 0.0
        %636 = vmatpush2.msra.mxu0 0.0
        %637 = vmatprep.subr.mxu0 0.0
        %638 = vmatpush2.msra.mxu0 0.0
        %639 = vmatprep.subr.mxu0 0.0
        %640 = vmatpush2.msra.mxu0 0.0
        %641 = vmatprep.subr.mxu0 0.0
        %642 = vmatpush2.msra.mxu0 0.0
        %643 = vmatprep.subr.mxu0 0.0
        %644 = vmatpush2.msra.mxu0 0.0
        %645 = vmatprep.subr.mxu0 0.0
        %646 = vmatpush2.msra.mxu0 0.0
        %647 = vmatprep.subr.mxu0 0.0
        %648 = vmatpush2.msra.mxu0 0.0
        %649 = vmatprep.subr.mxu0 0.0
        %650 = vmatpush2.msra.mxu0 0.0
        %651 = vmatprep.subr.mxu0 0.0
        %652 = vmatpush2.msra.mxu0 0.0
        %653 = vmatprep.subr.mxu0 0.0
        %654 = vmatpush2.msra.mxu0 0.0
        %655 = vmatprep.subr.mxu0 0.0
        %656 = vmatpush2.msra.mxu0 0.0
        %657 = vmatprep.subr.mxu0 0.0
        %658 = vmatpush2.msra.mxu0 0.0
        %659 = vmatprep.subr.mxu0 0.0
        %660 = vmatpush2.msra.mxu0 0.0
        %661 = vmatprep.subr.mxu0 0.0
        %662 = vmatpush2.msra.mxu0 0.0
        %663 = vmatprep.subr.mxu0 0.0
        %664 = vmatpush2.msra.mxu0 0.0
        %665 = vmatprep.mubr.f32.mxu0 0.0
        %666 = vmatmul.mubr.f32.gmra.mxu0 %v596
        %v667 = vpop.f32.mrf.mxu0
        %v668 = vadd.f32 0.0, %v667
        %v669 = vpop.f32.mrf.mxu0
        %670 = vmatprep.mubr.f32.mxu0 0.0
        %671 = vmatmul.mubr.f32.gmra.mxu0 %v598
        %v672 = vpop.f32.mrf.mxu0
        %v673 = vadd.f32 0.0, %v672
        %v674 = vpop.f32.mrf.mxu0
        %675 = vdwg.mxu0
        %676 = vmatprep.subr.mxu0 0.0
        %677 = vmatpush1.msra.mxu0 %v574
        %678 = vmatprep.subr.mxu0 0.0
        %679 = vmatpush1.msra.mxu0 %v573
        %680 = vmatprep.subr.mxu0 0.0
        %681 = vmatpush1.msra.mxu0 %v572
        %682 = vmatprep.subr.mxu0 0.0
        %683 = vmatpush1.msra.mxu0 %v571
        %684 = vmatprep.subr.mxu0 0.0
        %685 = vmatpush1.msra.mxu0 %v570
        %686 = vmatprep.subr.mxu0 0.0
        %687 = vmatpush1.msra.mxu0 %v569
        %688 = vmatprep.subr.mxu0 0.0
        %689 = vmatpush1.msra.mxu0 %v568
        %690 = vmatprep.subr.mxu0 0.0
        %691 = vmatpush1.msra.mxu0 %v567
        %692 = vmatprep.subr.mxu0 0.0
        %693 = vmatpush1.msra.mxu0 %v566
        %694 = vmatprep.subr.mxu0 0.0
        %695 = vmatpush1.msra.mxu0 %v565
        %696 = vmatprep.subr.mxu0 0.0
        %697 = vmatpush1.msra.mxu0 %v564
        %698 = vmatprep.subr.mxu0 0.0
        %699 = vmatpush1.msra.mxu0 %v563
        %700 = vmatprep.subr.mxu0 0.0
        %701 = vmatpush1.msra.mxu0 %v562
        %702 = vmatprep.subr.mxu0 0.0
        %703 = vmatpush1.msra.mxu0 %v561
        %704 = vmatprep.subr.mxu0 0.0
        %705 = vmatpush1.msra.mxu0 %v560
        %706 = vmatprep.subr.mxu0 0.0
        %707 = vmatpush1.msra.mxu0 %v559
        %708 = vmatprep.subr.mxu0 0.0
        %709 = vmatpush2.msra.mxu0 0.0
        %710 = vmatprep.subr.mxu0 0.0
        %711 = vmatpush2.msra.mxu0 0.0
        %712 = vmatprep.subr.mxu0 0.0
        %713 = vmatpush2.msra.mxu0 0.0
        %714 = vmatprep.subr.mxu0 0.0
        %715 = vmatpush2.msra.mxu0 0.0
        %716 = vmatprep.subr.mxu0 0.0
        %717 = vmatpush2.msra.mxu0 0.0
        %718 = vmatprep.subr.mxu0 0.0
        %719 = vmatpush2.msra.mxu0 0.0
        %720 = vmatprep.subr.mxu0 0.0
        %721 = vmatpush2.msra.mxu0 0.0
        %722 = vmatprep.subr.mxu0 0.0
        %723 = vmatpush2.msra.mxu0 0.0
        %724 = vmatprep.subr.mxu0 0.0
        %725 = vmatpush2.msra.mxu0 0.0
        %726 = vmatprep.subr.mxu0 0.0
        %727 = vmatpush2.msra.mxu0 0.0
        %728 = vmatprep.subr.mxu0 0.0
        %729 = vmatpush2.msra.mxu0 0.0
        %730 = vmatprep.subr.mxu0 0.0
        %731 = vmatpush2.msra.mxu0 0.0
        %732 = vmatprep.subr.mxu0 0.0
        %733 = vmatpush2.msra.mxu0 0.0
        %734 = vmatprep.subr.mxu0 0.0
        %735 = vmatpush2.msra.mxu0 0.0
        %736 = vmatprep.subr.mxu0 0.0
        %737 = vmatpush2.msra.mxu0 0.0
        %738 = vmatprep.subr.mxu0 0.0
        %739 = vmatpush2.msra.mxu0 0.0
        %740 = vmatprep.mubr.f32.mxu0 0.0
        %741 = vmatmul.mubr.f32.gmra.mxu0 %v557
        %v742 = vpop.f32.mrf.mxu0
        %v743 = vadd.f32 %v668, %v742
        %v744 = vpop.f32.mrf.mxu0
        %745 = vmatprep.mubr.f32.mxu0 0.0
        %746 = vmatmul.mubr.f32.gmra.mxu0 %v553
        %v747 = vpop.f32.mrf.mxu0
        %v748 = vadd.f32 %v673, %v747
        %v749 = vpop.f32.mrf.mxu0
        %750 = vdwg.mxu0
        %s751 = scalar_lea.vmem [#allocation5], 256
        %v752 = vld [vmem:[%s751] sm:$0xff]
        %v753 = vld [vmem:[%s751 + $0x8] sm:$0xff]
        %v754 = vld [vmem:[%s751 + $0x10] sm:$0xff]
        %v755 = vld [vmem:[%s751 + $0x18] sm:$0xff]
        %v756 = vld [vmem:[%s751 + $0x20] sm:$0xff]
        %v757 = vld [vmem:[%s751 + $0x28] sm:$0xff]
        %v758 = vld [vmem:[%s751 + $0x30] sm:$0xff]
        %v759 = vld [vmem:[%s751 + $0x38] sm:$0xff]
        %v760 = vld [vmem:[%s751 + $0x40] sm:$0xff]
        %v761 = vld [vmem:[%s751 + $0x48] sm:$0xff]
        %v762 = vld [vmem:[%s751 + $0x50] sm:$0xff]
        %v763 = vld [vmem:[%s751 + $0x58] sm:$0xff]
        %v764 = vld [vmem:[%s751 + $0x60] sm:$0xff]
        %v765 = vld [vmem:[%s751 + $0x68] sm:$0xff]
        %v766 = vld [vmem:[%s751 + $0x70] sm:$0xff]
        %v767 = vld [vmem:[%s751 + $0x78] sm:$0xff]
        %v768 = vrot.slane %v557, 2
        %v769 = vrot.slane %v553, 2
        %v770 = vsel %vm450, %v768, %v769
        %v771 = vrot.slane %v558, 2
        %v772 = vsel %vm450, %v769, %v771
        %775 = vmatprep.subr.mxu0 0.0
        %776 = vmatpush1.msra.mxu0 %v767
        %777 = vmatprep.subr.mxu0 0.0
        %778 = vmatpush1.msra.mxu0 %v766
        %779 = vmatprep.subr.mxu0 0.0
        %780 = vmatpush1.msra.mxu0 %v765
        %781 = vmatprep.subr.mxu0 0.0
        %782 = vmatpush1.msra.mxu0 %v764
        %783 = vmatprep.subr.mxu0 0.0
        %784 = vmatpush1.msra.mxu0 %v763
        %785 = vmatprep.subr.mxu0 0.0
        %786 = vmatpush1.msra.mxu0 %v762
        %787 = vmatprep.subr.mxu0 0.0
        %788 = vmatpush1.msra.mxu0 %v761
        %789 = vmatprep.subr.mxu0 0.0
        %790 = vmatpush1.msra.mxu0 %v760
        %791 = vmatprep.subr.mxu0 0.0
        %792 = vmatpush1.msra.mxu0 %v759
        %793 = vmatprep.subr.mxu0 0.0
        %794 = vmatpush1.msra.mxu0 %v758
        %795 = vmatprep.subr.mxu0 0.0
        %796 = vmatpush1.msra.mxu0 %v757
        %797 = vmatprep.subr.mxu0 0.0
        %798 = vmatpush1.msra.mxu0 %v756
        %799 = vmatprep.subr.mxu0 0.0
        %800 = vmatpush1.msra.mxu0 %v755
        %801 = vmatprep.subr.mxu0 0.0
        %802 = vmatpush1.msra.mxu0 %v754
        %803 = vmatprep.subr.mxu0 0.0
        %804 = vmatpush1.msra.mxu0 %v753
        %805 = vmatprep.subr.mxu0 0.0
        %806 = vmatpush1.msra.mxu0 %v752
        %807 = vmatprep.subr.mxu0 0.0
        %808 = vmatpush2.msra.mxu0 0.0
        %809 = vmatprep.subr.mxu0 0.0
        %810 = vmatpush2.msra.mxu0 0.0
        %811 = vmatprep.subr.mxu0 0.0
        %812 = vmatpush2.msra.mxu0 0.0
        %813 = vmatprep.subr.mxu0 0.0
        %814 = vmatpush2.msra.mxu0 0.0
        %815 = vmatprep.subr.mxu0 0.0
        %816 = vmatpush2.msra.mxu0 0.0
        %817 = vmatprep.subr.mxu0 0.0
        %818 = vmatpush2.msra.mxu0 0.0
        %819 = vmatprep.subr.mxu0 0.0
        %820 = vmatpush2.msra.mxu0 0.0
        %821 = vmatprep.subr.mxu0 0.0
        %822 = vmatpush2.msra.mxu0 0.0
        %823 = vmatprep.subr.mxu0 0.0
        %824 = vmatpush2.msra.mxu0 0.0
        %825 = vmatprep.subr.mxu0 0.0
        %826 = vmatpush2.msra.mxu0 0.0
        %827 = vmatprep.subr.mxu0 0.0
        %828 = vmatpush2.msra.mxu0 0.0
        %829 = vmatprep.subr.mxu0 0.0
        %830 = vmatpush2.msra.mxu0 0.0
        %831 = vmatprep.subr.mxu0 0.0
        %832 = vmatpush2.msra.mxu0 0.0
        %833 = vmatprep.subr.mxu0 0.0
        %834 = vmatpush2.msra.mxu0 0.0
        %835 = vmatprep.subr.mxu0 0.0
        %836 = vmatpush2.msra.mxu0 0.0
        %837 = vmatprep.subr.mxu0 0.0
        %838 = vmatpush2.msra.mxu0 0.0
        %839 = vmatprep.mubr.f32.mxu0 0.0
        %840 = vmatmul.mubr.f32.gmra.mxu0 %v770
        %v841 = vpop.f32.mrf.mxu0
        %v842 = vadd.f32 0.0, %v841
        %v843 = vpop.f32.mrf.mxu0
        %844 = vmatprep.mubr.f32.mxu0 0.0
        %845 = vmatmul.mubr.f32.gmra.mxu0 %v772
        %v846 = vpop.f32.mrf.mxu0
        %v847 = vadd.f32 0.0, %v846
        %v848 = vpop.f32.mrf.mxu0
        %849 = vdwg.mxu0
        %v850 = vadd.f32 %v743, %v842
        %v851 = vadd.f32 %v748, %v847
        %v852 = vld [vmem:[%s4] sm:$0x1]
        %v854 = vlaneseq
        %v855 = vshrl.u32 %v854, 7
        %v856 = vsub.s32 0, %v855
        %v857 = vrot.slane %v852, %v856
        %v859 = vadd.f32 %v850, %v857
        %v860 = vadd.f32 %v851, %v857
        %v861 = vmax.f32 %v859, 0.0
        %v862 = vmax.f32 %v860, 0.0
        %863 = vst [vmem:[%s247] sm:$0xff] %v861
        %864 = vst [vmem:[%s247 + $0x8] sm:$0xff] %v862
        %s865 = sand.u32 %s139, 1
        %s866 = scalar_lea.sflag [#allocation4], %s865
        %s867 = sand.u32 %s139, 1
        %s868 = smul.addr %s867, 16
        %s869 = scalar_lea.vmem [#allocation7], %s868
        // Predicated region
        $region49: #{tpu_custom_call.1} parent=39 // pred_check
          %p870 = pneg %p149
        $region50: #{tpu_custom_call.1} parent=39 // pred_check_branch
          %872 = sbr.rel (%p870) target = $region52
        $region51: #{tpu_custom_call.1} parent=39 // pred_region
          %s874 = ssub.s32 256, 256
          %875 = vsyncadd %s866, %s874
          %s876 = smul.addr %s21, 2
          %s877 = smul.addr %s876, 128
          %s878 = scalar_lea.hbm %s5, %s877
          %s879 = sshll.u32 %s869, 4
          %s880 = int_to_ptr.vmem [resolvable:$true] %s879
          %885 = dma.vmem_to_hbm [thread:$0]  %s880, 256, %s878, %s866, 128, 128, 8
        $region52: #{tpu_custom_call.1} parent=39 // pred_fallthru
          _
      $region40: #{tpu_custom_call.1} parent=5 // pred_fallthru
        _
      %p886 = scmp.le.s32.totalorder 2, %s16
      // Predicated region
      $region53: #{tpu_custom_call.1} parent=5 // pred_check
        %p887 = pneg %p886
      $region54: #{tpu_custom_call.1} parent=5 // pred_check_branch
        %889 = sbr.rel (%p887) target = $region56
      $region55: #{tpu_custom_call.1} parent=5 // pred_region
        %s890 = ssub.s32 %s16, 2
        // Predicated region
        $region57: #{tpu_custom_call.1} parent=55 // pred_check
          %p891 = pneg %p155
        $region58: #{tpu_custom_call.1} parent=55 // pred_check_branch
          %893 = sbr.rel (%p891) target = $region60
        $region59: #{tpu_custom_call.1} parent=55 // pred_region
          %s894 = sand.u32 %s140, 1
          %s895 = scalar_lea.sflag [#allocation4], %s894
          %s896 = sand.u32 %s140, 1
          %s897 = smul.addr %s896, 16
          %s898 = scalar_lea.vmem [#allocation7], %s897
          %899 = dma.done %s895, 256
        $region60: #{tpu_custom_call.1} parent=55 // pred_fallthru
          _
      $region56: #{tpu_custom_call.1} parent=5 // pred_fallthru
        _
    $region6: #{tpu_custom_call.1} parent=1 // loop_footer
      %s20 = sadd.s32 1, %s16
    $region7: #{tpu_custom_call.1} parent=1 // loop_footer_branch
      %15 = sbr.rel target = $region3
    $region8: #{tpu_custom_call.1} parent=1 // loop_exit
      _
    %900 = vsyncpa [#allocation3], 1
    %s901 = scalar_lea.sflag [#allocation3], 1
    %902 = vsyncpa %s901, 1
    %903 = vsyncpa [#allocation6], 1
    %904 = vsyncpa [#allocation4], 1
    %s905 = scalar_lea.sflag [#allocation4], 1
    %906 = vsyncpa %s905, 1

</llo_original>
